<compile_context>
chip_gen: v7x
topology: tpu7x:2x2x1
jax: 0.10.0
libtpu: 0.0.40
codegen_flags: <defaults>
</compile_context>

<pallas_src>
import functools

import jax
import jax.numpy as jnp
from jax.experimental import pallas as pl
from jax.experimental.pallas import tpu as pltpu


def _mnr_fused_kernel(xq_ref, xp_ref, xn_ref, wemb_ref, wdiff_ref, out_ref,
                      *, scale, lambda_uni):
    # xq_ref/xp_ref/xn_ref: [B, H]   raw features for query / positive / negative
    # wemb_ref:             [H, D]   embedding projection
    # wdiff_ref:            [H, 1]   W_cls[:, 0] - W_cls[:, 1] (2-class logit diff)
    # out_ref:              [1, 1]   scalar loss in SMEM
    xq = xq_ref[...].astype(jnp.float32)
    xp = xp_ref[...].astype(jnp.float32)
    xn = xn_ref[...].astype(jnp.float32)
    wemb = wemb_ref[...].astype(jnp.float32)
    wdiff = wdiff_ref[...].astype(jnp.float32)

    # --- encoder projections (MXU) ---
    emb_q = jnp.dot(xq, wemb, preferred_element_type=jnp.float32)  # [B, D]
    emb_p = jnp.dot(xp, wemb, preferred_element_type=jnp.float32)  # [B, D]
    emb_n = jnp.dot(xn, wemb, preferred_element_type=jnp.float32)  # [B, D]

    # --- L2 row normalization via rsqrt (EUP) ---
    eps = 1e-12

    def _l2n(e):
        return e * jax.lax.rsqrt(jnp.sum(e * e, axis=-1, keepdims=True) + eps)

    qn = _l2n(emb_q)
    pn = _l2n(emb_p)
    nn = _l2n(emb_n)

    # --- cosine-similarity scores; contract last dims, no transpose ---
    dnums = (((1,), (1,)), ((), ()))
    s_pos = jax.lax.dot_general(qn, pn, dnums,
                                preferred_element_type=jnp.float32) * scale  # [B, B]
    s_neg = jax.lax.dot_general(qn, nn, dnums,
                                preferred_element_type=jnp.float32) * scale  # [B, B]

    # --- cross entropy with labels = arange(B); positives are diag(s_pos) ---
    # logsumexp over the (virtual) concat([s_pos, s_neg], axis=1) without
    # materializing the concatenation.
    row_max = jnp.maximum(jnp.max(s_pos, axis=-1, keepdims=True),
                          jnp.max(s_neg, axis=-1, keepdims=True))        # [B, 1]
    sum_exp = (jnp.sum(jnp.exp(s_pos - row_max), axis=-1, keepdims=True) +
               jnp.sum(jnp.exp(s_neg - row_max), axis=-1, keepdims=True))
    lse = row_max + jnp.log(sum_exp)                                      # [B, 1]

    row_ids = jax.lax.broadcasted_iota(jnp.int32, s_pos.shape, 0)
    col_ids = jax.lax.broadcasted_iota(jnp.int32, s_pos.shape, 1)
    diag = jnp.sum(jnp.where(row_ids == col_ids, s_pos, 0.0),
                   axis=-1, keepdims=True)                                # [B, 1]
    ce = jnp.mean(lse - diag)

    # --- class-prediction KLDiv(batchmean) vs uniform 0.5, 2-class closed form ---
    # For 2-class logits (a, b) with d = a - b:
    #   sum_c 0.5*(log 0.5 - log_softmax(c)) = log 0.5 + 0.5*|d| + log(1 + exp(-|d|))
    dq = jnp.dot(xq, wdiff, preferred_element_type=jnp.float32)  # [B, 1]
    dp = jnp.dot(xp, wdiff, preferred_element_type=jnp.float32)  # [B, 1]
    dn = jnp.dot(xn, wdiff, preferred_element_type=jnp.float32)  # [B, 1]

    log_half = jnp.float32(jnp.log(0.5))

    def _kl_rows(d):
        ad = jnp.abs(d)
        return log_half + 0.5 * ad + jnp.log(1.0 + jnp.exp(-ad))

    n_rows = 3 * xq.shape[0]
    kl = (jnp.sum(_kl_rows(dq)) + jnp.sum(_kl_rows(dp)) + jnp.sum(_kl_rows(dn))) / n_rows

    # Matches the original module: overall_loss = CE + lambda_uni * (lambda_uni * KL)
    klclass = lambda_uni * kl
    loss = ce + lambda_uni * klclass

    # TODO(synk): uni_q > 0 branch (pdist-based UNIFORM regularizer) is not
    # taken with the default uni_q=0.0 and is omitted here.
    # TODO(synk): for production batch sizes, tile queries (parallel) and the
    # 2B key axis (arbitrary, last) with an online-LSE accumulator instead of
    # the gridless full-block version; re-derive kv-tile sizes for v7x 64 MiB VMEM.
    out_ref[0, 0] = loss


def mnr_generator_loss(x_q, x_p, x_n, W_emb, W_cls, *, scale=20.0, lambda_uni=0.01):
    B, H = x_q.shape
    D = W_emb.shape[1]

    # 2-class logit difference weights: only the difference of the two class
    # logits is needed for KL vs a uniform 0.5 target (lane-dense alternative
    # to carrying a [3B, 2] tensor through the kernel).
    w_diff = (W_cls[:, 0:1] - W_cls[:, 1:2]).astype(jnp.float32)  # [H, 1]

    flops = int(2 * 3 * B * H * D      # encoder projections
                + 2 * 2 * B * B * D    # similarity matmuls
                + 2 * 3 * B * H)       # class-diff matvecs
    transcendentals = int(2 * B * B    # exps in logsumexp
                          + 3 * B     # rsqrt
                          + B         # log in lse
                          + 2 * 3 * B)  # exp + log in class KL
    bytes_accessed = int(4 * (3 * B * H + H * D + H + 1))

    kernel = functools.partial(_mnr_fused_kernel, scale=scale, lambda_uni=lambda_uni)
    out = pl.pallas_call(
        kernel,
        out_shape=jax.ShapeDtypeStruct((1, 1), jnp.float32),
        in_specs=[pl.BlockSpec(memory_space=pltpu.MemorySpace.VMEM)] * 5,
        out_specs=pl.BlockSpec(memory_space=pltpu.MemorySpace.SMEM),
        cost_estimate=pl.CostEstimate(flops=flops,
                                      transcendentals=transcendentals,
                                      bytes_accessed=bytes_accessed),
        compiler_params=pltpu.CompilerParams(vmem_limit_bytes=32 * 1024 * 1024),
    )(x_q, x_p, x_n, W_emb, w_diff)
    return out[0, 0]


def _reference_loss(x_q, x_p, x_n, W_emb, W_cls, scale, lambda_uni):
    # Literal re-implementation of the original PyTorch forward in plain JAX.
    emb_q, emb_p, emb_n = (x @ W_emb for x in (x_q, x_p, x_n))
    emb_a = emb_q
    emb_b = jnp.concatenate([emb_p, emb_n], axis=0)
    a_n = emb_a / jnp.maximum(jnp.linalg.norm(emb_a, axis=1, keepdims=True), 1e-12)
    b_n = emb_b / jnp.maximum(jnp.linalg.norm(emb_b, axis=1, keepdims=True), 1e-12)
    scores = a_n @ b_n.T * scale
    B = scores.shape[0]
    logp_scores = jax.nn.log_softmax(scores, axis=1)
    ce = -jnp.mean(logp_scores[jnp.arange(B), jnp.arange(B)])
    cls_all = jnp.concatenate([x_q @ W_cls, x_p @ W_cls, x_n @ W_cls], axis=0)
    logp_cls = jax.nn.log_softmax(cls_all, axis=1)
    kl = jnp.sum(0.5 * (jnp.log(0.5) - logp_cls)) / cls_all.shape[0]
    return ce + lambda_uni * (lambda_uni * kl)


if __name__ == "__main__":
    B, H_IN, D = 8, 16, 32
    scale, lambda_uni = 20.0, 0.01

    key = jax.random.PRNGKey(0)
    k_we, k_wc, k_q, k_p, k_n = jax.random.split(key, 5)

    # Deterministic synthetic "SentenceTransformer" parameters.
    W_emb = jax.random.normal(k_we, (H_IN, D), dtype=jnp.float32) * 0.1
    W_cls = jax.random.normal(k_wc, (H_IN, 2), dtype=jnp.float32) * 0.1

    # Three sentence_features: query, positive, negative.
    x_q = jax.random.normal(k_q, (B, H_IN), dtype=jnp.float32)
    x_p = jax.random.normal(k_p, (B, H_IN), dtype=jnp.float32)
    x_n = jax.random.normal(k_n, (B, H_IN), dtype=jnp.float32)

    loss = mnr_generator_loss(x_q, x_p, x_n, W_emb, W_cls,
                              scale=scale, lambda_uni=lambda_uni)
    loss = jax.block_until_ready(loss)

    ref = _reference_loss(x_q, x_p, x_n, W_emb, W_cls, scale, lambda_uni)
    assert jnp.allclose(loss, ref, rtol=1e-4, atol=1e-4), (loss, ref)

    print("KERNEL_OK")
</pallas_src>

<mosaic_0001>
module attributes {stable_mosaic.version = 11 : i64} {
  func.func @_mnr_fused_kernel(%arg0: memref<8x16xf32, #tpu.memory_space<vmem>>, %arg1: memref<8x16xf32, #tpu.memory_space<vmem>>, %arg2: memref<8x16xf32, #tpu.memory_space<vmem>>, %arg3: memref<16x32xf32, #tpu.memory_space<vmem>>, %arg4: memref<16x1xf32, #tpu.memory_space<vmem>>, %arg5: memref<1x1xf32, #tpu.memory_space<smem>>) attributes {dimension_semantics = [], scalar_prefetch = 0 : i64, scratch_operands = 0 : i64, tpu.core_type = #tpu.core_type<tc>} {
    %c0 = arith.constant 0 : index
    %c0_0 = arith.constant 0 : index
    %0 = vector.load %arg0[%c0, %c0_0] : memref<8x16xf32, #tpu.memory_space<vmem>>, vector<8x16xf32>
    %c0_1 = arith.constant 0 : index
    %c0_2 = arith.constant 0 : index
    %1 = vector.load %arg1[%c0_1, %c0_2] : memref<8x16xf32, #tpu.memory_space<vmem>>, vector<8x16xf32>
    %c0_3 = arith.constant 0 : index
    %c0_4 = arith.constant 0 : index
    %2 = vector.load %arg2[%c0_3, %c0_4] : memref<8x16xf32, #tpu.memory_space<vmem>>, vector<8x16xf32>
    %c0_5 = arith.constant 0 : index
    %c0_6 = arith.constant 0 : index
    %3 = vector.load %arg3[%c0_5, %c0_6] : memref<16x32xf32, #tpu.memory_space<vmem>>, vector<16x32xf32>
    %c0_7 = arith.constant 0 : index
    %c0_8 = arith.constant 0 : index
    %4 = vector.load %arg4[%c0_7, %c0_8] : memref<16x1xf32, #tpu.memory_space<vmem>>, vector<16x1xf32>
    %cst = arith.constant dense<0.000000e+00> : vector<8x32xf32>
    %5 = tpu.matmul %0, %3, %cst {dimension_numbers = #tpu.dot_dimension_numbers<[1], [0], [0], [1], [0, 0, 1, 1], [], []>} : vector<8x16xf32>, vector<16x32xf32>, vector<8x32xf32> -> vector<8x32xf32>
    %cst_9 = arith.constant dense<0.000000e+00> : vector<8x32xf32>
    %6 = tpu.matmul %1, %3, %cst_9 {dimension_numbers = #tpu.dot_dimension_numbers<[1], [0], [0], [1], [0, 0, 1, 1], [], []>} : vector<8x16xf32>, vector<16x32xf32>, vector<8x32xf32> -> vector<8x32xf32>
    %cst_10 = arith.constant dense<0.000000e+00> : vector<8x32xf32>
    %7 = tpu.matmul %2, %3, %cst_10 {dimension_numbers = #tpu.dot_dimension_numbers<[1], [0], [0], [1], [0, 0, 1, 1], [], []>} : vector<8x16xf32>, vector<16x32xf32>, vector<8x32xf32> -> vector<8x32xf32>
    %8 = arith.mulf %5, %5 : vector<8x32xf32>
    %cst_11 = arith.constant dense<0.000000e+00> : vector<8xf32>
    %9 = vector.multi_reduction <add>, %8, %cst_11 [1] : vector<8x32xf32> to vector<8xf32>
    %10 = vector.shape_cast %9 : vector<8xf32> to vector<8x1xf32>
    %cst_12 = arith.constant 9.99999996E-13 : f32
    %11 = vector.broadcast %cst_12 : f32 to vector<8x1xf32>
    %12 = arith.addf %10, %11 : vector<8x1xf32>
    %13 = math.rsqrt %12 : vector<8x1xf32>
    %14 = vector.broadcast %13 : vector<8x1xf32> to vector<8x32xf32>
    %15 = arith.mulf %5, %14 : vector<8x32xf32>
    %16 = arith.mulf %6, %6 : vector<8x32xf32>
    %cst_13 = arith.constant dense<0.000000e+00> : vector<8xf32>
    %17 = vector.multi_reduction <add>, %16, %cst_13 [1] : vector<8x32xf32> to vector<8xf32>
    %18 = vector.shape_cast %17 : vector<8xf32> to vector<8x1xf32>
    %cst_14 = arith.constant 9.99999996E-13 : f32
    %19 = vector.broadcast %cst_14 : f32 to vector<8x1xf32>
    %20 = arith.addf %18, %19 : vector<8x1xf32>
    %21 = math.rsqrt %20 : vector<8x1xf32>
    %22 = vector.broadcast %21 : vector<8x1xf32> to vector<8x32xf32>
    %23 = arith.mulf %6, %22 : vector<8x32xf32>
    %24 = arith.mulf %7, %7 : vector<8x32xf32>
    %cst_15 = arith.constant dense<0.000000e+00> : vector<8xf32>
    %25 = vector.multi_reduction <add>, %24, %cst_15 [1] : vector<8x32xf32> to vector<8xf32>
    %26 = vector.shape_cast %25 : vector<8xf32> to vector<8x1xf32>
    %cst_16 = arith.constant 9.99999996E-13 : f32
    %27 = vector.broadcast %cst_16 : f32 to vector<8x1xf32>
    %28 = arith.addf %26, %27 : vector<8x1xf32>
    %29 = math.rsqrt %28 : vector<8x1xf32>
    %30 = vector.broadcast %29 : vector<8x1xf32> to vector<8x32xf32>
    %31 = arith.mulf %7, %30 : vector<8x32xf32>
    %cst_17 = arith.constant dense<0.000000e+00> : vector<8x8xf32>
    %32 = tpu.matmul %15, %23, %cst_17 {dimension_numbers = #tpu.dot_dimension_numbers<[1], [1], [0], [0], [0, 0, 1, 0], [], []>} : vector<8x32xf32>, vector<8x32xf32>, vector<8x8xf32> -> vector<8x8xf32>
    %cst_18 = arith.constant 2.000000e+01 : f32
    %33 = vector.broadcast %cst_18 : f32 to vector<8x8xf32>
    %34 = arith.mulf %32, %33 : vector<8x8xf32>
    %cst_19 = arith.constant dense<0.000000e+00> : vector<8x8xf32>
    %35 = tpu.matmul %15, %31, %cst_19 {dimension_numbers = #tpu.dot_dimension_numbers<[1], [1], [0], [0], [0, 0, 1, 0], [], []>} : vector<8x32xf32>, vector<8x32xf32>, vector<8x8xf32> -> vector<8x8xf32>
    %cst_20 = arith.constant 2.000000e+01 : f32
    %36 = vector.broadcast %cst_20 : f32 to vector<8x8xf32>
    %37 = arith.mulf %35, %36 : vector<8x8xf32>
    %cst_21 = arith.constant dense<0xFF800000> : vector<8xf32>
    %38 = vector.multi_reduction <maximumf>, %34, %cst_21 [1] : vector<8x8xf32> to vector<8xf32>
    %39 = vector.shape_cast %38 : vector<8xf32> to vector<8x1xf32>
    %cst_22 = arith.constant dense<0xFF800000> : vector<8xf32>
    %40 = vector.multi_reduction <maximumf>, %37, %cst_22 [1] : vector<8x8xf32> to vector<8xf32>
    %41 = vector.shape_cast %40 : vector<8xf32> to vector<8x1xf32>
    %42 = arith.maximumf %39, %41 : vector<8x1xf32>
    %43 = vector.broadcast %42 : vector<8x1xf32> to vector<8x8xf32>
    %44 = arith.subf %34, %43 : vector<8x8xf32>
    %45 = math.exp %44 : vector<8x8xf32>
    %cst_23 = arith.constant dense<0.000000e+00> : vector<8xf32>
    %46 = vector.multi_reduction <add>, %45, %cst_23 [1] : vector<8x8xf32> to vector<8xf32>
    %47 = vector.shape_cast %46 : vector<8xf32> to vector<8x1xf32>
    %48 = vector.broadcast %42 : vector<8x1xf32> to vector<8x8xf32>
    %49 = arith.subf %37, %48 : vector<8x8xf32>
    %50 = math.exp %49 : vector<8x8xf32>
    %cst_24 = arith.constant dense<0.000000e+00> : vector<8xf32>
    %51 = vector.multi_reduction <add>, %50, %cst_24 [1] : vector<8x8xf32> to vector<8xf32>
    %52 = vector.shape_cast %51 : vector<8xf32> to vector<8x1xf32>
    %53 = arith.addf %47, %52 : vector<8x1xf32>
    %54 = math.log %53 : vector<8x1xf32>
    %55 = arith.addf %42, %54 : vector<8x1xf32>
    %56 = tpu.iota {dimensions = array<i32: 0>} : vector<8x8xi32>
    %57 = tpu.iota {dimensions = array<i32: 1>} : vector<8x8xi32>
    %58 = arith.cmpi eq, %56, %57 : vector<8x8xi32>
    %cst_25 = arith.constant 0.000000e+00 : f32
    %59 = vector.broadcast %cst_25 : f32 to vector<8x8xf32>
    %60 = arith.select %58, %34, %59 : vector<8x8xi1>, vector<8x8xf32>
    %cst_26 = arith.constant dense<0.000000e+00> : vector<8xf32>
    %61 = vector.multi_reduction <add>, %60, %cst_26 [1] : vector<8x8xf32> to vector<8xf32>
    %62 = vector.shape_cast %61 : vector<8xf32> to vector<8x1xf32>
    %63 = arith.subf %55, %62 : vector<8x1xf32>
    %64 = vector.shape_cast %63 : vector<8x1xf32> to vector<1x8x1xf32>
    %cst_27 = arith.constant dense<0.000000e+00> : vector<1xf32>
    %65 = vector.multi_reduction <add>, %64, %cst_27 [1, 2] : vector<1x8x1xf32> to vector<1xf32>
    %66 = vector.shape_cast %65 : vector<1xf32> to vector<1x1x1xf32>
    %67 = vector.extract %66[0, 0, 0] : f32 from vector<1x1x1xf32>
    %cst_28 = arith.constant 8.000000e+00 : f32
    %68 = arith.divf %67, %cst_28 : f32
    %cst_29 = arith.constant dense<0.000000e+00> : vector<8x1xf32>
    %69 = tpu.matmul %0, %4, %cst_29 {dimension_numbers = #tpu.dot_dimension_numbers<[1], [0], [0], [1], [0, 0, 1, 1], [], []>} : vector<8x16xf32>, vector<16x1xf32>, vector<8x1xf32> -> vector<8x1xf32>
    %cst_30 = arith.constant dense<0.000000e+00> : vector<8x1xf32>
    %70 = tpu.matmul %1, %4, %cst_30 {dimension_numbers = #tpu.dot_dimension_numbers<[1], [0], [0], [1], [0, 0, 1, 1], [], []>} : vector<8x16xf32>, vector<16x1xf32>, vector<8x1xf32> -> vector<8x1xf32>
    %cst_31 = arith.constant dense<0.000000e+00> : vector<8x1xf32>
    %71 = tpu.matmul %2, %4, %cst_31 {dimension_numbers = #tpu.dot_dimension_numbers<[1], [0], [0], [1], [0, 0, 1, 1], [], []>} : vector<8x16xf32>, vector<16x1xf32>, vector<8x1xf32> -> vector<8x1xf32>
    %cst_32 = arith.constant 5.000000e-01 : f32
    %72 = math.log %cst_32 : f32
    %73 = math.absf %69 : vector<8x1xf32>
    %cst_33 = arith.constant 5.000000e-01 : f32
    %74 = vector.broadcast %cst_33 : f32 to vector<8x1xf32>
    %75 = arith.mulf %74, %73 : vector<8x1xf32>
    %76 = vector.broadcast %72 : f32 to vector<8x1xf32>
    %77 = arith.addf %76, %75 : vector<8x1xf32>
    %cst_34 = arith.constant 0.000000e+00 : f32
    %78 = vector.broadcast %cst_34 : f32 to vector<8x1xf32>
    %79 = arith.subf %78, %73 : vector<8x1xf32>
    %80 = math.exp %79 : vector<8x1xf32>
    %cst_35 = arith.constant 1.000000e+00 : f32
    %81 = vector.broadcast %cst_35 : f32 to vector<8x1xf32>
    %82 = arith.addf %81, %80 : vector<8x1xf32>
    %83 = math.log %82 : vector<8x1xf32>
    %84 = arith.addf %77, %83 : vector<8x1xf32>
    %85 = vector.shape_cast %84 : vector<8x1xf32> to vector<1x8x1xf32>
    %cst_36 = arith.constant dense<0.000000e+00> : vector<1xf32>
    %86 = vector.multi_reduction <add>, %85, %cst_36 [1, 2] : vector<1x8x1xf32> to vector<1xf32>
    %87 = vector.shape_cast %86 : vector<1xf32> to vector<1x1x1xf32>
    %88 = vector.extract %87[0, 0, 0] : f32 from vector<1x1x1xf32>
    %89 = math.absf %70 : vector<8x1xf32>
    %cst_37 = arith.constant 5.000000e-01 : f32
    %90 = vector.broadcast %cst_37 : f32 to vector<8x1xf32>
    %91 = arith.mulf %90, %89 : vector<8x1xf32>
    %92 = vector.broadcast %72 : f32 to vector<8x1xf32>
    %93 = arith.addf %92, %91 : vector<8x1xf32>
    %cst_38 = arith.constant 0.000000e+00 : f32
    %94 = vector.broadcast %cst_38 : f32 to vector<8x1xf32>
    %95 = arith.subf %94, %89 : vector<8x1xf32>
    %96 = math.exp %95 : vector<8x1xf32>
    %cst_39 = arith.constant 1.000000e+00 : f32
    %97 = vector.broadcast %cst_39 : f32 to vector<8x1xf32>
    %98 = arith.addf %97, %96 : vector<8x1xf32>
    %99 = math.log %98 : vector<8x1xf32>
    %100 = arith.addf %93, %99 : vector<8x1xf32>
    %101 = vector.shape_cast %100 : vector<8x1xf32> to vector<1x8x1xf32>
    %cst_40 = arith.constant dense<0.000000e+00> : vector<1xf32>
    %102 = vector.multi_reduction <add>, %101, %cst_40 [1, 2] : vector<1x8x1xf32> to vector<1xf32>
    %103 = vector.shape_cast %102 : vector<1xf32> to vector<1x1x1xf32>
    %104 = vector.extract %103[0, 0, 0] : f32 from vector<1x1x1xf32>
    %105 = arith.addf %88, %104 : f32
    %106 = math.absf %71 : vector<8x1xf32>
    %cst_41 = arith.constant 5.000000e-01 : f32
    %107 = vector.broadcast %cst_41 : f32 to vector<8x1xf32>
    %108 = arith.mulf %107, %106 : vector<8x1xf32>
    %109 = vector.broadcast %72 : f32 to vector<8x1xf32>
    %110 = arith.addf %109, %108 : vector<8x1xf32>
    %cst_42 = arith.constant 0.000000e+00 : f32
    %111 = vector.broadcast %cst_42 : f32 to vector<8x1xf32>
    %112 = arith.subf %111, %106 : vector<8x1xf32>
    %113 = math.exp %112 : vector<8x1xf32>
    %cst_43 = arith.constant 1.000000e+00 : f32
    %114 = vector.broadcast %cst_43 : f32 to vector<8x1xf32>
    %115 = arith.addf %114, %113 : vector<8x1xf32>
    %116 = math.log %115 : vector<8x1xf32>
    %117 = arith.addf %110, %116 : vector<8x1xf32>
    %118 = vector.shape_cast %117 : vector<8x1xf32> to vector<1x8x1xf32>
    %cst_44 = arith.constant dense<0.000000e+00> : vector<1xf32>
    %119 = vector.multi_reduction <add>, %118, %cst_44 [1, 2] : vector<1x8x1xf32> to vector<1xf32>
    %120 = vector.shape_cast %119 : vector<1xf32> to vector<1x1x1xf32>
    %121 = vector.extract %120[0, 0, 0] : f32 from vector<1x1x1xf32>
    %122 = arith.addf %105, %121 : f32
    %cst_45 = arith.constant 2.400000e+01 : f32
    %123 = arith.divf %122, %cst_45 : f32
    %cst_46 = arith.constant 0.00999999977 : f32
    %124 = arith.mulf %cst_46, %123 : f32
    %cst_47 = arith.constant 0.00999999977 : f32
    %125 = arith.mulf %cst_47, %124 : f32
    %126 = arith.addf %68, %125 : f32
    %c0_48 = arith.constant 0 : index
    %c0_49 = arith.constant 0 : index
    %127 = memref.load %arg5[%c0_48, %c0_49] : memref<1x1xf32, #tpu.memory_space<smem>>
    memref.store %126, %arg5[%c0_48, %c0_49] : memref<1x1xf32, #tpu.memory_space<smem>>
    return
  }
}

</mosaic_0001>

<llo_original>
// kernel: tpu_custom_call.1
$region0: #{tpu_custom_call.1}
  #allocation0 [shape = 'u32[]', space=smem, size = 0x4, offset = 0x4, fixed_abs, tag = 'smem constant byte address 0x4 - core index']
  #allocation1 [shape = 'u32[144,128]{1,0:T(1,128)}', space=vmem, size = 0x12000, scoped, tag = 'internal scratch']
  %s0 = inlined_call_operand.vmem [shape: f32[8,16], index: 0, kind: input, shape index: {}]
  %s1 = inlined_call_operand.hbm [shape: f32[8,16], index: 1, kind: input, shape index: {}]
  %s2 = inlined_call_operand.hbm [shape: f32[8,16], index: 2, kind: input, shape index: {}]
  %s3 = inlined_call_operand.vmem [shape: f32[16,32], index: 3, kind: input, shape index: {}]
  %s4 = inlined_call_operand.vmem [shape: f32[16,1], index: 4, kind: input, shape index: {}]
  %s5 = inlined_call_operand.hbm [shape: f32[1,1], index: 5, kind: output, shape index: {}]
  %s6 = sld [smem:[#allocation0]]
  $region38: #{tpu_custom_call.1} parent=0
    _
  %s8 = ssub.s32 1, %s6
  %s9 = scalar_select 0, %s8, %s6
  $region1: #{tpu_custom_call.1} parent=0
    #allocation2 [shape = 'u8[4096]{0}', space=vmem, size = 0x1000, scoped, tag = 'input window, operand 1, single buffered']
    #allocation3 [shape = 's32[1]{0}', space=sflag, size = 0x4, scoped, tag = 'scoped memory for tpu_custom_call.1']
    #allocation4 [shape = 's32[1]{0}', space=sflag, size = 0x4, scoped, tag = 'scoped memory for tpu_custom_call.1']
    #allocation5 [shape = 'u8[4096]{0}', space=vmem, size = 0x1000, scoped, tag = 'input window, operand 2, single buffered']
    #allocation6 [shape = 's32[1]{0}', space=sflag, size = 0x4, scoped, tag = 'scoped memory for tpu_custom_call.1']
    #allocation7 [shape = 'u8[512]{0}', space=smem, size = 0x200, scoped, tag = 'output window, operand 0, single buffered']
    %10 = vsyncpa [#allocation3], 0
    %11 = vsyncpa [#allocation6], 0
    %12 = vsyncpa [#allocation4], 0
    // Predicated region
    $region2: #{tpu_custom_call.1} parent=1 // pred_check
      _
    $region3: #{tpu_custom_call.1} parent=1 // pred_check_branch
      %14 = sbr.rel (0) target = $region5
    $region4: #{tpu_custom_call.1} parent=1 // pred_region
      _
    $region5: #{tpu_custom_call.1} parent=1 // pred_fallthru
      _
    // Predicated region
    $region6: #{tpu_custom_call.1} parent=1 // pred_check
      _
    $region7: #{tpu_custom_call.1} parent=1 // pred_check_branch
      %16 = sbr.rel (0) target = $region9
    $region8: #{tpu_custom_call.1} parent=1 // pred_region
      %s18 = ssub.s32 128, 128
      %19 = vsyncadd [#allocation3], %s18
      %s21 = sshll.u32 [#allocation2], 4
      %s22 = int_to_ptr.vmem [resolvable:$true] %s21
      %24 = dma.hbm_to_vmem [thread:$0]  %s1, 128, %s22, [#allocation3]
    $region9: #{tpu_custom_call.1} parent=1 // pred_fallthru
      _
    // Predicated region
    $region10: #{tpu_custom_call.1} parent=1 // pred_check
      _
    $region11: #{tpu_custom_call.1} parent=1 // pred_check_branch
      %26 = sbr.rel (0) target = $region13
    $region12: #{tpu_custom_call.1} parent=1 // pred_region
      %s28 = ssub.s32 128, 128
      %29 = vsyncadd [#allocation6], %s28
      %s31 = sshll.u32 [#allocation5], 4
      %s32 = int_to_ptr.vmem [resolvable:$true] %s31
      %34 = dma.hbm_to_vmem [thread:$0]  %s2, 128, %s32, [#allocation6]
    $region13: #{tpu_custom_call.1} parent=1 // pred_fallthru
      _
    // Predicated region
    $region14: #{tpu_custom_call.1} parent=1 // pred_check
      _
    $region15: #{tpu_custom_call.1} parent=1 // pred_check_branch
      %36 = sbr.rel (0) target = $region17
    $region16: #{tpu_custom_call.1} parent=1 // pred_region
      _
    $region17: #{tpu_custom_call.1} parent=1 // pred_fallthru
      _
    // Predicated region
    $region18: #{tpu_custom_call.1} parent=1 // pred_check
      _
    $region19: #{tpu_custom_call.1} parent=1 // pred_check_branch
      %38 = sbr.rel (0) target = $region21
    $region20: #{tpu_custom_call.1} parent=1 // pred_region
      _
    $region21: #{tpu_custom_call.1} parent=1 // pred_fallthru
      _
    // Predicated region
    $region22: #{tpu_custom_call.1} parent=1 // pred_check
      _
    $region23: #{tpu_custom_call.1} parent=1 // pred_check_branch
      %40 = sbr.rel (0) target = $region25
    $region24: #{tpu_custom_call.1} parent=1 // pred_region
      %41 = dma.done [#allocation3], 128
    $region25: #{tpu_custom_call.1} parent=1 // pred_fallthru
      _
    // Predicated region
    $region26: #{tpu_custom_call.1} parent=1 // pred_check
      _
    $region27: #{tpu_custom_call.1} parent=1 // pred_check_branch
      %43 = sbr.rel (0) target = $region29
    $region28: #{tpu_custom_call.1} parent=1 // pred_region
      %44 = dma.done [#allocation6], 128
    $region29: #{tpu_custom_call.1} parent=1 // pred_fallthru
      _
    %v45 = vld [vmem:[%s0] sm:$0xff]
    %v46 = vld [vmem:[#allocation2] sm:$0xff]
    %v47 = vld [vmem:[#allocation5] sm:$0xff]
    %v48 = vld [vmem:[%s3] sm:$0xff]
    %v49 = vld [vmem:[%s3 + $0x8] sm:$0xff]
    %v50 = vld [vmem:[%s4] sm:$0xff]
    %v51 = vld [vmem:[%s4 + $0x8] sm:$0xff]
    %vm52 = vcmask 130048
    %v54 = vsel %vm52, %v45, 0
    %56 = vmatprep.subr.mxu0 0.0
    %57 = vmatpush1.msra.mxu0 %v48
    %58 = vmatprep.subr.mxu0 0.0
    %59 = vmatpush1.msra.mxu0 %v49
    %60 = vmatprep.subr.mxu0 0.0
    %61 = vmatpush1.msra.mxu0 0.0
    %62 = vmatprep.subr.mxu0 0.0
    %63 = vmatpush1.msra.mxu0 0.0
    %64 = vmatprep.subr.mxu0 0.0
    %65 = vmatpush1.msra.mxu0 0.0
    %66 = vmatprep.subr.mxu0 0.0
    %67 = vmatpush1.msra.mxu0 0.0
    %68 = vmatprep.subr.mxu0 0.0
    %69 = vmatpush1.msra.mxu0 0.0
    %70 = vmatprep.subr.mxu0 0.0
    %71 = vmatpush1.msra.mxu0 0.0
    %72 = vmatprep.subr.mxu0 0.0
    %73 = vmatpush1.msra.mxu0 0.0
    %74 = vmatprep.subr.mxu0 0.0
    %75 = vmatpush1.msra.mxu0 0.0
    %76 = vmatprep.subr.mxu0 0.0
    %77 = vmatpush1.msra.mxu0 0.0
    %78 = vmatprep.subr.mxu0 0.0
    %79 = vmatpush1.msra.mxu0 0.0
    %80 = vmatprep.subr.mxu0 0.0
    %81 = vmatpush1.msra.mxu0 0.0
    %82 = vmatprep.subr.mxu0 0.0
    %83 = vmatpush1.msra.mxu0 0.0
    %84 = vmatprep.subr.mxu0 0.0
    %85 = vmatpush1.msra.mxu0 0.0
    %86 = vmatprep.subr.mxu0 0.0
    %87 = vmatpush1.msra.mxu0 0.0
    %88 = vmatprep.subr.mxu0 0.0
    %89 = vmatpush1.msra.mxu0 0.0
    %90 = vmatprep.subr.mxu0 0.0
    %91 = vmatpush1.msra.mxu0 0.0
    %92 = vmatprep.subr.mxu0 0.0
    %93 = vmatpush1.msra.mxu0 0.0
    %94 = vmatprep.subr.mxu0 0.0
    %95 = vmatpush1.msra.mxu0 0.0
    %96 = vmatprep.subr.mxu0 0.0
    %97 = vmatpush1.msra.mxu0 0.0
    %98 = vmatprep.subr.mxu0 0.0
    %99 = vmatpush1.msra.mxu0 0.0
    %100 = vmatprep.subr.mxu0 0.0
    %101 = vmatpush1.msra.mxu0 0.0
    %102 = vmatprep.subr.mxu0 0.0
    %103 = vmatpush1.msra.mxu0 0.0
    %104 = vmatprep.subr.mxu0 0.0
    %105 = vmatpush1.msra.mxu0 0.0
    %106 = vmatprep.subr.mxu0 0.0
    %107 = vmatpush1.msra.mxu0 0.0
    %108 = vmatprep.subr.mxu0 0.0
    %109 = vmatpush1.msra.mxu0 0.0
    %110 = vmatprep.subr.mxu0 0.0
    %111 = vmatpush1.msra.mxu0 0.0
    %112 = vmatprep.subr.mxu0 0.0
    %113 = vmatpush1.msra.mxu0 0.0
    %114 = vmatprep.subr.mxu0 0.0
    %115 = vmatpush1.msra.mxu0 0.0
    %116 = vmatprep.subr.mxu0 0.0
    %117 = vmatpush1.msra.mxu0 0.0
    %118 = vmatprep.subr.mxu0 0.0
    %119 = vmatpush1.msra.mxu0 0.0
    %120 = vmatprep.mubr.f32.mxu0 0.0
    %121 = vmatmul.mubr.f32.gmra.mrb[0].mxu0 %v54
    %v122 = vpop.f32.mrb[0].mxu0
    %v123 = vadd.f32 0.0, %v122
    %v124 = vpop.f32.mrb[0].mxu0
    %125 = vdwg.mxu0
    %v127 = vsel %vm52, %v46, 0
    %129 = vmatprep.subr.mxu0 0.0
    %130 = vmatpush1.msra.mxu0 %v48
    %131 = vmatprep.subr.mxu0 0.0
    %132 = vmatpush1.msra.mxu0 %v49
    %133 = vmatprep.subr.mxu0 0.0
    %134 = vmatpush1.msra.mxu0 0.0
    %135 = vmatprep.subr.mxu0 0.0
    %136 = vmatpush1.msra.mxu0 0.0
    %137 = vmatprep.subr.mxu0 0.0
    %138 = vmatpush1.msra.mxu0 0.0
    %139 = vmatprep.subr.mxu0 0.0
    %140 = vmatpush1.msra.mxu0 0.0
    %141 = vmatprep.subr.mxu0 0.0
    %142 = vmatpush1.msra.mxu0 0.0
    %143 = vmatprep.subr.mxu0 0.0
    %144 = vmatpush1.msra.mxu0 0.0
    %145 = vmatprep.subr.mxu0 0.0
    %146 = vmatpush1.msra.mxu0 0.0
    %147 = vmatprep.subr.mxu0 0.0
    %148 = vmatpush1.msra.mxu0 0.0
    %149 = vmatprep.subr.mxu0 0.0
    %150 = vmatpush1.msra.mxu0 0.0
    %151 = vmatprep.subr.mxu0 0.0
    %152 = vmatpush1.msra.mxu0 0.0
    %153 = vmatprep.subr.mxu0 0.0
    %154 = vmatpush1.msra.mxu0 0.0
    %155 = vmatprep.subr.mxu0 0.0
    %156 = vmatpush1.msra.mxu0 0.0
    %157 = vmatprep.subr.mxu0 0.0
    %158 = vmatpush1.msra.mxu0 0.0
    %159 = vmatprep.subr.mxu0 0.0
    %160 = vmatpush1.msra.mxu0 0.0
    %161 = vmatprep.subr.mxu0 0.0
    %162 = vmatpush1.msra.mxu0 0.0
    %163 = vmatprep.subr.mxu0 0.0
    %164 = vmatpush1.msra.mxu0 0.0
    %165 = vmatprep.subr.mxu0 0.0
    %166 = vmatpush1.msra.mxu0 0.0
    %167 = vmatprep.subr.mxu0 0.0
    %168 = vmatpush1.msra.mxu0 0.0
    %169 = vmatprep.subr.mxu0 0.0
    %170 = vmatpush1.msra.mxu0 0.0
    %171 = vmatprep.subr.mxu0 0.0
    %172 = vmatpush1.msra.mxu0 0.0
    %173 = vmatprep.subr.mxu0 0.0
    %174 = vmatpush1.msra.mxu0 0.0
    %175 = vmatprep.subr.mxu0 0.0
    %176 = vmatpush1.msra.mxu0 0.0
    %177 = vmatprep.subr.mxu0 0.0
    %178 = vmatpush1.msra.mxu0 0.0
    %179 = vmatprep.subr.mxu0 0.0
    %180 = vmatpush1.msra.mxu0 0.0
    %181 = vmatprep.subr.mxu0 0.0
    %182 = vmatpush1.msra.mxu0 0.0
    %183 = vmatprep.subr.mxu0 0.0
    %184 = vmatpush1.msra.mxu0 0.0
    %185 = vmatprep.subr.mxu0 0.0
    %186 = vmatpush1.msra.mxu0 0.0
    %187 = vmatprep.subr.mxu0 0.0
    %188 = vmatpush1.msra.mxu0 0.0
    %189 = vmatprep.subr.mxu0 0.0
    %190 = vmatpush1.msra.mxu0 0.0
    %191 = vmatprep.subr.mxu0 0.0
    %192 = vmatpush1.msra.mxu0 0.0
    %193 = vmatprep.mubr.f32.mxu0 0.0
    %194 = vmatmul.mubr.f32.gmra.mrb[0].mxu0 %v127
    %v195 = vpop.f32.mrb[0].mxu0
    %v196 = vadd.f32 0.0, %v195
    %v197 = vpop.f32.mrb[0].mxu0
    %198 = vdwg.mxu0
    %v200 = vsel %vm52, %v47, 0
    %202 = vmatprep.subr.mxu0 0.0
    %203 = vmatpush1.msra.mxu0 %v48
    %204 = vmatprep.subr.mxu0 0.0
    %205 = vmatpush1.msra.mxu0 %v49
    %206 = vmatprep.subr.mxu0 0.0
    %207 = vmatpush1.msra.mxu0 0.0
    %208 = vmatprep.subr.mxu0 0.0
    %209 = vmatpush1.msra.mxu0 0.0
    %210 = vmatprep.subr.mxu0 0.0
    %211 = vmatpush1.msra.mxu0 0.0
    %212 = vmatprep.subr.mxu0 0.0
    %213 = vmatpush1.msra.mxu0 0.0
    %214 = vmatprep.subr.mxu0 0.0
    %215 = vmatpush1.msra.mxu0 0.0
    %216 = vmatprep.subr.mxu0 0.0
    %217 = vmatpush1.msra.mxu0 0.0
    %218 = vmatprep.subr.mxu0 0.0
    %219 = vmatpush1.msra.mxu0 0.0
    %220 = vmatprep.subr.mxu0 0.0
    %221 = vmatpush1.msra.mxu0 0.0
    %222 = vmatprep.subr.mxu0 0.0
    %223 = vmatpush1.msra.mxu0 0.0
    %224 = vmatprep.subr.mxu0 0.0
    %225 = vmatpush1.msra.mxu0 0.0
    %226 = vmatprep.subr.mxu0 0.0
    %227 = vmatpush1.msra.mxu0 0.0
    %228 = vmatprep.subr.mxu0 0.0
    %229 = vmatpush1.msra.mxu0 0.0
    %230 = vmatprep.subr.mxu0 0.0
    %231 = vmatpush1.msra.mxu0 0.0
    %232 = vmatprep.subr.mxu0 0.0
    %233 = vmatpush1.msra.mxu0 0.0
    %234 = vmatprep.subr.mxu0 0.0
    %235 = vmatpush1.msra.mxu0 0.0
    %236 = vmatprep.subr.mxu0 0.0
    %237 = vmatpush1.msra.mxu0 0.0
    %238 = vmatprep.subr.mxu0 0.0
    %239 = vmatpush1.msra.mxu0 0.0
    %240 = vmatprep.subr.mxu0 0.0
    %241 = vmatpush1.msra.mxu0 0.0
    %242 = vmatprep.subr.mxu0 0.0
    %243 = vmatpush1.msra.mxu0 0.0
    %244 = vmatprep.subr.mxu0 0.0
    %245 = vmatpush1.msra.mxu0 0.0
    %246 = vmatprep.subr.mxu0 0.0
    %247 = vmatpush1.msra.mxu0 0.0
    %248 = vmatprep.subr.mxu0 0.0
    %249 = vmatpush1.msra.mxu0 0.0
    %250 = vmatprep.subr.mxu0 0.0
    %251 = vmatpush1.msra.mxu0 0.0
    %252 = vmatprep.subr.mxu0 0.0
    %253 = vmatpush1.msra.mxu0 0.0
    %254 = vmatprep.subr.mxu0 0.0
    %255 = vmatpush1.msra.mxu0 0.0
    %256 = vmatprep.subr.mxu0 0.0
    %257 = vmatpush1.msra.mxu0 0.0
    %258 = vmatprep.subr.mxu0 0.0
    %259 = vmatpush1.msra.mxu0 0.0
    %260 = vmatprep.subr.mxu0 0.0
    %261 = vmatpush1.msra.mxu0 0.0
    %262 = vmatprep.subr.mxu0 0.0
    %263 = vmatpush1.msra.mxu0 0.0
    %264 = vmatprep.subr.mxu0 0.0
    %265 = vmatpush1.msra.mxu0 0.0
    %266 = vmatprep.mubr.f32.mxu0 0.0
    %267 = vmatmul.mubr.f32.gmra.mrb[0].mxu0 %v200
    %v268 = vpop.f32.mrb[0].mxu0
    %v269 = vadd.f32 0.0, %v268
    %v270 = vpop.f32.mrb[0].mxu0
    %271 = vdwg.mxu0
    %v272 = vmul.f32 %v123, %v123
    %vm273 = vcmask 261120
    %v274 = vsel %vm273, %v272, 0.0
    %275 = vadd.xlane.f32.xlu0 %v274
    %v276 = vpop.xlane.xlu0 %275
    %v277 = vadd.f32 %v276, 1e-12
    %v278 = vrsqrt.pop %v277
    %v279 = vmul.f32 %v123, %v278
    %v280 = vmul.f32 %v196, %v196
    %v281 = vsel %vm273, %v280, 0.0
    %282 = vadd.xlane.f32.xlu0 %v281
    %v283 = vpop.xlane.xlu0 %282
    %v284 = vadd.f32 %v283, 1e-12
    %v285 = vrsqrt.pop %v284
    %v286 = vmul.f32 %v196, %v285
    %v287 = vmul.f32 %v269, %v269
    %v288 = vsel %vm273, %v287, 0.0
    %289 = vadd.xlane.f32.xlu0 %v288
    %v290 = vpop.xlane.xlu0 %289
    %v291 = vadd.f32 %v290, 1e-12
    %v292 = vrsqrt.pop %v291
    %v293 = vmul.f32 %v269, %v292
    %v295 = vsel %vm273, %v279, 0
    %v298 = vsel %vm273, %v286, 0
    %300 = vmatprep.subr.mxu0 0.0
    %301 = vmatpush1.xpose.msra.mxu0 %v298
    %302 = vmatprep.subr.mxu0 0.0
    %303 = vmatpush1.xpose.msra.mxu0 0.0
    %304 = vmatprep.subr.mxu0 0.0
    %305 = vmatpush1.xpose.msra.mxu0 0.0
    %306 = vmatprep.subr.mxu0 0.0
    %307 = vmatpush1.xpose.msra.mxu0 0.0
    %308 = vmatprep.subr.mxu0 0.0
    %309 = vmatpush1.xpose.msra.mxu0 0.0
    %310 = vmatprep.subr.mxu0 0.0
    %311 = vmatpush1.xpose.msra.mxu0 0.0
    %312 = vmatprep.subr.mxu0 0.0
    %313 = vmatpush1.xpose.msra.mxu0 0.0
    %314 = vmatprep.subr.mxu0 0.0
    %315 = vmatpush1.xpose.msra.mxu0 0.0
    %316 = vmatprep.subr.mxu0 0.0
    %317 = vmatpush1.xpose.msra.mxu0 0.0
    %318 = vmatprep.subr.mxu0 0.0
    %319 = vmatpush1.xpose.msra.mxu0 0.0
    %320 = vmatprep.subr.mxu0 0.0
    %321 = vmatpush1.xpose.msra.mxu0 0.0
    %322 = vmatprep.subr.mxu0 0.0
    %323 = vmatpush1.xpose.msra.mxu0 0.0
    %324 = vmatprep.subr.mxu0 0.0
    %325 = vmatpush1.xpose.msra.mxu0 0.0
    %326 = vmatprep.subr.mxu0 0.0
    %327 = vmatpush1.xpose.msra.mxu0 0.0
    %328 = vmatprep.subr.mxu0 0.0
    %329 = vmatpush1.xpose.msra.mxu0 0.0
    %330 = vmatprep.subr.mxu0 0.0
    %331 = vmatpush1.xpose.msra.mxu0 0.0
    %332 = vmatprep.subr.mxu0 0.0
    %333 = vmatpush1.xpose.msra.mxu0 0.0
    %334 = vmatprep.subr.mxu0 0.0
    %335 = vmatpush1.xpose.msra.mxu0 0.0
    %336 = vmatprep.subr.mxu0 0.0
    %337 = vmatpush1.xpose.msra.mxu0 0.0
    %338 = vmatprep.subr.mxu0 0.0
    %339 = vmatpush1.xpose.msra.mxu0 0.0
    %340 = vmatprep.subr.mxu0 0.0
    %341 = vmatpush1.xpose.msra.mxu0 0.0
    %342 = vmatprep.subr.mxu0 0.0
    %343 = vmatpush1.xpose.msra.mxu0 0.0
    %344 = vmatprep.subr.mxu0 0.0
    %345 = vmatpush1.xpose.msra.mxu0 0.0
    %346 = vmatprep.subr.mxu0 0.0
    %347 = vmatpush1.xpose.msra.mxu0 0.0
    %348 = vmatprep.subr.mxu0 0.0
    %349 = vmatpush1.xpose.msra.mxu0 0.0
    %350 = vmatprep.subr.mxu0 0.0
    %351 = vmatpush1.xpose.msra.mxu0 0.0
    %352 = vmatprep.subr.mxu0 0.0
    %353 = vmatpush1.xpose.msra.mxu0 0.0
    %354 = vmatprep.subr.mxu0 0.0
    %355 = vmatpush1.xpose.msra.mxu0 0.0
    %356 = vmatprep.subr.mxu0 0.0
    %357 = vmatpush1.xpose.msra.mxu0 0.0
    %358 = vmatprep.subr.mxu0 0.0
    %359 = vmatpush1.xpose.msra.mxu0 0.0
    %360 = vmatprep.subr.mxu0 0.0
    %361 = vmatpush1.xpose.msra.mxu0 0.0
    %362 = vmatprep.subr.mxu0 0.0
    %363 = vmatpush1.xpose.msra.mxu0 0.0
    %364 = vmatprep.mubr.f32.mxu0 0.0
    %365 = vmatmul.mubr.f32.gmra.mrb[0].mxu0 %v295
    %v366 = vpop.f32.mrb[0].mxu0
    %v367 = vadd.f32 0.0, %v366
    %v368 = vpop.f32.mrb[0].mxu0
    %369 = vdwg.mxu0
    %v370 = vmul.f32 %v367, 20.0
    %v372 = vsel %vm273, %v293, 0
    %374 = vmatprep.subr.mxu0 0.0
    %375 = vmatpush1.xpose.msra.mxu0 %v372
    %376 = vmatprep.subr.mxu0 0.0
    %377 = vmatpush1.xpose.msra.mxu0 0.0
    %378 = vmatprep.subr.mxu0 0.0
    %379 = vmatpush1.xpose.msra.mxu0 0.0
    %380 = vmatprep.subr.mxu0 0.0
    %381 = vmatpush1.xpose.msra.mxu0 0.0
    %382 = vmatprep.subr.mxu0 0.0
    %383 = vmatpush1.xpose.msra.mxu0 0.0
    %384 = vmatprep.subr.mxu0 0.0
    %385 = vmatpush1.xpose.msra.mxu0 0.0
    %386 = vmatprep.subr.mxu0 0.0
    %387 = vmatpush1.xpose.msra.mxu0 0.0
    %388 = vmatprep.subr.mxu0 0.0
    %389 = vmatpush1.xpose.msra.mxu0 0.0
    %390 = vmatprep.subr.mxu0 0.0
    %391 = vmatpush1.xpose.msra.mxu0 0.0
    %392 = vmatprep.subr.mxu0 0.0
    %393 = vmatpush1.xpose.msra.mxu0 0.0
    %394 = vmatprep.subr.mxu0 0.0
    %395 = vmatpush1.xpose.msra.mxu0 0.0
    %396 = vmatprep.subr.mxu0 0.0
    %397 = vmatpush1.xpose.msra.mxu0 0.0
    %398 = vmatprep.subr.mxu0 0.0
    %399 = vmatpush1.xpose.msra.mxu0 0.0
    %400 = vmatprep.subr.mxu0 0.0
    %401 = vmatpush1.xpose.msra.mxu0 0.0
    %402 = vmatprep.subr.mxu0 0.0
    %403 = vmatpush1.xpose.msra.mxu0 0.0
    %404 = vmatprep.subr.mxu0 0.0
    %405 = vmatpush1.xpose.msra.mxu0 0.0
    %406 = vmatprep.subr.mxu0 0.0
    %407 = vmatpush1.xpose.msra.mxu0 0.0
    %408 = vmatprep.subr.mxu0 0.0
    %409 = vmatpush1.xpose.msra.mxu0 0.0
    %410 = vmatprep.subr.mxu0 0.0
    %411 = vmatpush1.xpose.msra.mxu0 0.0
    %412 = vmatprep.subr.mxu0 0.0
    %413 = vmatpush1.xpose.msra.mxu0 0.0
    %414 = vmatprep.subr.mxu0 0.0
    %415 = vmatpush1.xpose.msra.mxu0 0.0
    %416 = vmatprep.subr.mxu0 0.0
    %417 = vmatpush1.xpose.msra.mxu0 0.0
    %418 = vmatprep.subr.mxu0 0.0
    %419 = vmatpush1.xpose.msra.mxu0 0.0
    %420 = vmatprep.subr.mxu0 0.0
    %421 = vmatpush1.xpose.msra.mxu0 0.0
    %422 = vmatprep.subr.mxu0 0.0
    %423 = vmatpush1.xpose.msra.mxu0 0.0
    %424 = vmatprep.subr.mxu0 0.0
    %425 = vmatpush1.xpose.msra.mxu0 0.0
    %426 = vmatprep.subr.mxu0 0.0
    %427 = vmatpush1.xpose.msra.mxu0 0.0
    %428 = vmatprep.subr.mxu0 0.0
    %429 = vmatpush1.xpose.msra.mxu0 0.0
    %430 = vmatprep.subr.mxu0 0.0
    %431 = vmatpush1.xpose.msra.mxu0 0.0
    %432 = vmatprep.subr.mxu0 0.0
    %433 = vmatpush1.xpose.msra.mxu0 0.0
    %434 = vmatprep.subr.mxu0 0.0
    %435 = vmatpush1.xpose.msra.mxu0 0.0
    %436 = vmatprep.subr.mxu0 0.0
    %437 = vmatpush1.xpose.msra.mxu0 0.0
    %438 = vmatprep.mubr.f32.mxu0 0.0
    %439 = vmatmul.mubr.f32.gmra.mrb[0].mxu0 %v295
    %v440 = vpop.f32.mrb[0].mxu0
    %v441 = vadd.f32 0.0, %v440
    %v442 = vpop.f32.mrb[0].mxu0
    %443 = vdwg.mxu0
    %v444 = vmul.f32 %v441, 20.0
    %vm445 = vcmask 64512
    %v446 = vsel %vm445, %v370, -inf
    %447 = vmax.xlane.f32.xlu0 %v446
    %v448 = vpop.xlane.xlu0 %447
    %v449 = vsel %vm445, %v444, -inf
    %450 = vmax.xlane.f32.xlu0 %v449
    %v451 = vpop.xlane.xlu0 %450
    %v452 = vmax.f32 %v448, %v451
    %v453 = vsub.f32 %v370, %v452
    %v454 = vmul.f32 %v453, 1.442695
    %v455 = vpow.pop %v454
    %v456 = vsel %vm445, %v455, 0.0
    %457 = vadd.xlane.f32.xlu0 %v456
    %v458 = vpop.xlane.xlu0 %457
    %v459 = vsub.f32 %v444, %v452
    %v460 = vmul.f32 %v459, 1.442695
    %v461 = vpow.pop %v460
    %v462 = vsel %vm445, %v461, 0.0
    %463 = vadd.xlane.f32.xlu0 %v462
    %v464 = vpop.xlane.xlu0 %463
    %v465 = vadd.f32 %v458, %v464
    %v466 = vlog2.pop %v465
    %v467 = vmul.f32 %v466, 0.6931472
    %v468 = vadd.f32 %v452, %v467
    %v469 = vlaneseq
    %v470 = vshrl.u32 %v469, 7
    %v471 = vlaneseq
    %v472 = vand.u32 %v471, 127
    %vm473 = vcmp.eq.s32.totalorder %v470, %v472
    %v474 = vsel %vm473, %v370, 0.0
    %v475 = vsel %vm445, %v474, 0.0
    %476 = vadd.xlane.f32.xlu0 %v475
    %v477 = vpop.xlane.xlu0 %476
    %v478 = vsub.f32 %v468, %v477
    %vm479 = vcmask 7168
    %v480 = vsel %vm479, %v478, 0.0
    %481 = vadd.xlane.f32.xlu0 %v480
    %v482 = vpop.xlane.xlu0 %481
    %v483 = vrot.slane %v482, 4
    %v484 = vadd.f32 %v482, %v483
    %v485 = vrot.slane %v484, 2
    %v486 = vadd.f32 %v484, %v485
    %v487 = vrot.slane %v486, 1
    %v488 = vadd.f32 %v486, %v487
    %s489 = vtos %v488
    %v490 = vrcp.pop 8.0
    %s491 = vtos %v490
    %s492 = smul.f32 %s489, %s491
    %493 = vmatprep.subr.mxu0 0.0
    %494 = vmatpush1.msra.mxu0 %v50
    %495 = vmatprep.subr.mxu0 0.0
    %496 = vmatpush1.msra.mxu0 %v51
    %497 = vmatprep.subr.mxu0 0.0
    %498 = vmatpush1.msra.mxu0 0.0
    %499 = vmatprep.subr.mxu0 0.0
    %500 = vmatpush1.msra.mxu0 0.0
    %501 = vmatprep.subr.mxu0 0.0
    %502 = vmatpush1.msra.mxu0 0.0
    %503 = vmatprep.subr.mxu0 0.0
    %504 = vmatpush1.msra.mxu0 0.0
    %505 = vmatprep.subr.mxu0 0.0
    %506 = vmatpush1.msra.mxu0 0.0
    %507 = vmatprep.subr.mxu0 0.0
    %508 = vmatpush1.msra.mxu0 0.0
    %509 = vmatprep.subr.mxu0 0.0
    %510 = vmatpush1.msra.mxu0 0.0
    %511 = vmatprep.subr.mxu0 0.0
    %512 = vmatpush1.msra.mxu0 0.0
    %513 = vmatprep.subr.mxu0 0.0
    %514 = vmatpush1.msra.mxu0 0.0
    %515 = vmatprep.subr.mxu0 0.0
    %516 = vmatpush1.msra.mxu0 0.0
    %517 = vmatprep.subr.mxu0 0.0
    %518 = vmatpush1.msra.mxu0 0.0
    %519 = vmatprep.subr.mxu0 0.0
    %520 = vmatpush1.msra.mxu0 0.0
    %521 = vmatprep.subr.mxu0 0.0
    %522 = vmatpush1.msra.mxu0 0.0
    %523 = vmatprep.subr.mxu0 0.0
    %524 = vmatpush1.msra.mxu0 0.0
    %525 = vmatprep.subr.mxu0 0.0
    %526 = vmatpush1.msra.mxu0 0.0
    %527 = vmatprep.subr.mxu0 0.0
    %528 = vmatpush1.msra.mxu0 0.0
    %529 = vmatprep.subr.mxu0 0.0
    %530 = vmatpush1.msra.mxu0 0.0
    %531 = vmatprep.subr.mxu0 0.0
    %532 = vmatpush1.msra.mxu0 0.0
    %533 = vmatprep.subr.mxu0 0.0
    %534 = vmatpush1.msra.mxu0 0.0
    %535 = vmatprep.subr.mxu0 0.0
    %536 = vmatpush1.msra.mxu0 0.0
    %537 = vmatprep.subr.mxu0 0.0
    %538 = vmatpush1.msra.mxu0 0.0
    %539 = vmatprep.subr.mxu0 0.0
    %540 = vmatpush1.msra.mxu0 0.0
    %541 = vmatprep.subr.mxu0 0.0
    %542 = vmatpush1.msra.mxu0 0.0
    %543 = vmatprep.subr.mxu0 0.0
    %544 = vmatpush1.msra.mxu0 0.0
    %545 = vmatprep.subr.mxu0 0.0
    %546 = vmatpush1.msra.mxu0 0.0
    %547 = vmatprep.subr.mxu0 0.0
    %548 = vmatpush1.msra.mxu0 0.0
    %549 = vmatprep.subr.mxu0 0.0
    %550 = vmatpush1.msra.mxu0 0.0
    %551 = vmatprep.subr.mxu0 0.0
    %552 = vmatpush1.msra.mxu0 0.0
    %553 = vmatprep.subr.mxu0 0.0
    %554 = vmatpush1.msra.mxu0 0.0
    %555 = vmatprep.subr.mxu0 0.0
    %556 = vmatpush1.msra.mxu0 0.0
    %557 = vmatprep.mubr.f32.mxu0 0.0
    %558 = vmatmul.mubr.f32.gmra.mrb[0].mxu0 %v54
    %v559 = vpop.f32.mrb[0].mxu0
    %v560 = vadd.f32 0.0, %v559
    %v561 = vpop.f32.mrb[0].mxu0
    %562 = vdwg.mxu0
    %563 = vmatprep.subr.mxu0 0.0
    %564 = vmatpush1.msra.mxu0 %v50
    %565 = vmatprep.subr.mxu0 0.0
    %566 = vmatpush1.msra.mxu0 %v51
    %567 = vmatprep.subr.mxu0 0.0
    %568 = vmatpush1.msra.mxu0 0.0
    %569 = vmatprep.subr.mxu0 0.0
    %570 = vmatpush1.msra.mxu0 0.0
    %571 = vmatprep.subr.mxu0 0.0
    %572 = vmatpush1.msra.mxu0 0.0
    %573 = vmatprep.subr.mxu0 0.0
    %574 = vmatpush1.msra.mxu0 0.0
    %575 = vmatprep.subr.mxu0 0.0
    %576 = vmatpush1.msra.mxu0 0.0
    %577 = vmatprep.subr.mxu0 0.0
    %578 = vmatpush1.msra.mxu0 0.0
    %579 = vmatprep.subr.mxu0 0.0
    %580 = vmatpush1.msra.mxu0 0.0
    %581 = vmatprep.subr.mxu0 0.0
    %582 = vmatpush1.msra.mxu0 0.0
    %583 = vmatprep.subr.mxu0 0.0
    %584 = vmatpush1.msra.mxu0 0.0
    %585 = vmatprep.subr.mxu0 0.0
    %586 = vmatpush1.msra.mxu0 0.0
    %587 = vmatprep.subr.mxu0 0.0
    %588 = vmatpush1.msra.mxu0 0.0
    %589 = vmatprep.subr.mxu0 0.0
    %590 = vmatpush1.msra.mxu0 0.0
    %591 = vmatprep.subr.mxu0 0.0
    %592 = vmatpush1.msra.mxu0 0.0
    %593 = vmatprep.subr.mxu0 0.0
    %594 = vmatpush1.msra.mxu0 0.0
    %595 = vmatprep.subr.mxu0 0.0
    %596 = vmatpush1.msra.mxu0 0.0
    %597 = vmatprep.subr.mxu0 0.0
    %598 = vmatpush1.msra.mxu0 0.0
    %599 = vmatprep.subr.mxu0 0.0
    %600 = vmatpush1.msra.mxu0 0.0
    %601 = vmatprep.subr.mxu0 0.0
    %602 = vmatpush1.msra.mxu0 0.0
    %603 = vmatprep.subr.mxu0 0.0
    %604 = vmatpush1.msra.mxu0 0.0
    %605 = vmatprep.subr.mxu0 0.0
    %606 = vmatpush1.msra.mxu0 0.0
    %607 = vmatprep.subr.mxu0 0.0
    %608 = vmatpush1.msra.mxu0 0.0
    %609 = vmatprep.subr.mxu0 0.0
    %610 = vmatpush1.msra.mxu0 0.0
    %611 = vmatprep.subr.mxu0 0.0
    %612 = vmatpush1.msra.mxu0 0.0
    %613 = vmatprep.subr.mxu0 0.0
    %614 = vmatpush1.msra.mxu0 0.0
    %615 = vmatprep.subr.mxu0 0.0
    %616 = vmatpush1.msra.mxu0 0.0
    %617 = vmatprep.subr.mxu0 0.0
    %618 = vmatpush1.msra.mxu0 0.0
    %619 = vmatprep.subr.mxu0 0.0
    %620 = vmatpush1.msra.mxu0 0.0
    %621 = vmatprep.subr.mxu0 0.0
    %622 = vmatpush1.msra.mxu0 0.0
    %623 = vmatprep.subr.mxu0 0.0
    %624 = vmatpush1.msra.mxu0 0.0
    %625 = vmatprep.subr.mxu0 0.0
    %626 = vmatpush1.msra.mxu0 0.0
    %627 = vmatprep.mubr.f32.mxu0 0.0
    %628 = vmatmul.mubr.f32.gmra.mrb[0].mxu0 %v127
    %v629 = vpop.f32.mrb[0].mxu0
    %v630 = vadd.f32 0.0, %v629
    %v631 = vpop.f32.mrb[0].mxu0
    %632 = vdwg.mxu0
    %633 = vmatprep.subr.mxu0 0.0
    %634 = vmatpush1.msra.mxu0 %v50
    %635 = vmatprep.subr.mxu0 0.0
    %636 = vmatpush1.msra.mxu0 %v51
    %637 = vmatprep.subr.mxu0 0.0
    %638 = vmatpush1.msra.mxu0 0.0
    %639 = vmatprep.subr.mxu0 0.0
    %640 = vmatpush1.msra.mxu0 0.0
    %641 = vmatprep.subr.mxu0 0.0
    %642 = vmatpush1.msra.mxu0 0.0
    %643 = vmatprep.subr.mxu0 0.0
    %644 = vmatpush1.msra.mxu0 0.0
    %645 = vmatprep.subr.mxu0 0.0
    %646 = vmatpush1.msra.mxu0 0.0
    %647 = vmatprep.subr.mxu0 0.0
    %648 = vmatpush1.msra.mxu0 0.0
    %649 = vmatprep.subr.mxu0 0.0
    %650 = vmatpush1.msra.mxu0 0.0
    %651 = vmatprep.subr.mxu0 0.0
    %652 = vmatpush1.msra.mxu0 0.0
    %653 = vmatprep.subr.mxu0 0.0
    %654 = vmatpush1.msra.mxu0 0.0
    %655 = vmatprep.subr.mxu0 0.0
    %656 = vmatpush1.msra.mxu0 0.0
    %657 = vmatprep.subr.mxu0 0.0
    %658 = vmatpush1.msra.mxu0 0.0
    %659 = vmatprep.subr.mxu0 0.0
    %660 = vmatpush1.msra.mxu0 0.0
    %661 = vmatprep.subr.mxu0 0.0
    %662 = vmatpush1.msra.mxu0 0.0
    %663 = vmatprep.subr.mxu0 0.0
    %664 = vmatpush1.msra.mxu0 0.0
    %665 = vmatprep.subr.mxu0 0.0
    %666 = vmatpush1.msra.mxu0 0.0
    %667 = vmatprep.subr.mxu0 0.0
    %668 = vmatpush1.msra.mxu0 0.0
    %669 = vmatprep.subr.mxu0 0.0
    %670 = vmatpush1.msra.mxu0 0.0
    %671 = vmatprep.subr.mxu0 0.0
    %672 = vmatpush1.msra.mxu0 0.0
    %673 = vmatprep.subr.mxu0 0.0
    %674 = vmatpush1.msra.mxu0 0.0
    %675 = vmatprep.subr.mxu0 0.0
    %676 = vmatpush1.msra.mxu0 0.0
    %677 = vmatprep.subr.mxu0 0.0
    %678 = vmatpush1.msra.mxu0 0.0
    %679 = vmatprep.subr.mxu0 0.0
    %680 = vmatpush1.msra.mxu0 0.0
    %681 = vmatprep.subr.mxu0 0.0
    %682 = vmatpush1.msra.mxu0 0.0
    %683 = vmatprep.subr.mxu0 0.0
    %684 = vmatpush1.msra.mxu0 0.0
    %685 = vmatprep.subr.mxu0 0.0
    %686 = vmatpush1.msra.mxu0 0.0
    %687 = vmatprep.subr.mxu0 0.0
    %688 = vmatpush1.msra.mxu0 0.0
    %689 = vmatprep.subr.mxu0 0.0
    %690 = vmatpush1.msra.mxu0 0.0
    %691 = vmatprep.subr.mxu0 0.0
    %692 = vmatpush1.msra.mxu0 0.0
    %693 = vmatprep.subr.mxu0 0.0
    %694 = vmatpush1.msra.mxu0 0.0
    %695 = vmatprep.subr.mxu0 0.0
    %696 = vmatpush1.msra.mxu0 0.0
    %697 = vmatprep.mubr.f32.mxu0 0.0
    %698 = vmatmul.mubr.f32.gmra.mrb[0].mxu0 %v200
    %v699 = vpop.f32.mrb[0].mxu0
    %v700 = vadd.f32 0.0, %v699
    %v701 = vpop.f32.mrb[0].mxu0
    %702 = vdwg.mxu0
    %v703 = vand.u32 2147483647, %v560
    %v704 = vmul.f32 %v703, 0.5
    %v705 = vadd.f32 %v704, -0.6931472
    %v706 = vsub.f32 0.0, %v703
    %v707 = vmul.f32 %v706, 1.442695
    %v708 = vpow.pop %v707
    %v709 = vadd.f32 %v708, 1.0
    %v710 = vlog2.pop %v709
    %v711 = vmul.f32 %v710, 0.6931472
    %v712 = vadd.f32 %v705, %v711
    %v713 = vsel %vm479, %v712, 0.0
    %714 = vadd.xlane.f32.xlu0 %v713
    %v715 = vpop.xlane.xlu0 %714
    %v716 = vrot.slane %v715, 4
    %v717 = vadd.f32 %v715, %v716
    %v718 = vrot.slane %v717, 2
    %v719 = vadd.f32 %v717, %v718
    %v720 = vrot.slane %v719, 1
    %v721 = vadd.f32 %v719, %v720
    %s722 = vtos %v721
    %v723 = vand.u32 2147483647, %v630
    %v724 = vmul.f32 %v723, 0.5
    %v725 = vadd.f32 %v724, -0.6931472
    %v726 = vsub.f32 0.0, %v723
    %v727 = vmul.f32 %v726, 1.442695
    %v728 = vpow.pop %v727
    %v729 = vadd.f32 %v728, 1.0
    %v730 = vlog2.pop %v729
    %v731 = vmul.f32 %v730, 0.6931472
    %v732 = vadd.f32 %v725, %v731
    %v733 = vsel %vm479, %v732, 0.0
    %734 = vadd.xlane.f32.xlu0 %v733
    %v735 = vpop.xlane.xlu0 %734
    %v736 = vrot.slane %v735, 4
    %v737 = vadd.f32 %v735, %v736
    %v738 = vrot.slane %v737, 2
    %v739 = vadd.f32 %v737, %v738
    %v740 = vrot.slane %v739, 1
    %v741 = vadd.f32 %v739, %v740
    %s742 = vtos %v741
    %s743 = sadd.f32 %s722, %s742
    %v744 = vand.u32 2147483647, %v700
    %v745 = vmul.f32 %v744, 0.5
    %v746 = vadd.f32 %v745, -0.6931472
    %v747 = vsub.f32 0.0, %v744
    %v748 = vmul.f32 %v747, 1.442695
    %v749 = vpow.pop %v748
    %v750 = vadd.f32 %v749, 1.0
    %v751 = vlog2.pop %v750
    %v752 = vmul.f32 %v751, 0.6931472
    %v753 = vadd.f32 %v746, %v752
    %v754 = vsel %vm479, %v753, 0.0
    %755 = vadd.xlane.f32.xlu0 %v754
    %v756 = vpop.xlane.xlu0 %755
    %v757 = vrot.slane %v756, 4
    %v758 = vadd.f32 %v756, %v757
    %v759 = vrot.slane %v758, 2
    %v760 = vadd.f32 %v758, %v759
    %v761 = vrot.slane %v760, 1
    %v762 = vadd.f32 %v760, %v761
    %s763 = vtos %v762
    %s764 = sadd.f32 %s743, %s763
    %v765 = vrcp.pop 24.0
    %s766 = vtos %v765
    %s767 = smul.f32 %s764, %s766
    %s768 = smul.f32 %s767, 0.01
    %s769 = smul.f32 %s768, 0.01
    %s770 = sadd.f32 %s492, %s769
    %s771 = scalar_lea.smem [#allocation7], 0
    %772 = sst [smem:[%s771]] %s770
    // Predicated region
    $region30: #{tpu_custom_call.1} parent=1 // pred_check
      _
    $region31: #{tpu_custom_call.1} parent=1 // pred_check_branch
      %774 = sbr.rel (0) target = $region33
    $region32: #{tpu_custom_call.1} parent=1 // pred_region
      %s776 = ssub.s32 16, 16
      %777 = vsyncadd [#allocation4], %s776
      %780 = dma.smem_to_hbm [#allocation7], 16, %s5, [#allocation4]
    $region33: #{tpu_custom_call.1} parent=1 // pred_fallthru
      _
    // Predicated region
    $region34: #{tpu_custom_call.1} parent=1 // pred_check
      _
    $region35: #{tpu_custom_call.1} parent=1 // pred_check_branch
      %782 = sbr.rel (0) target = $region37
    $region36: #{tpu_custom_call.1} parent=1 // pred_region
      %783 = dma.done [#allocation4], 16
    $region37: #{tpu_custom_call.1} parent=1 // pred_fallthru
      _
    %784 = sfence
    %785 = vsyncpa [#allocation3], 1
    %786 = vsyncpa [#allocation6], 1
    %787 = vsyncpa [#allocation4], 1

</llo_original>
